<compile_context>
chip_gen: v7x
topology: tpu7x:2x2x1
jax: 0.10.0
libtpu: 0.0.40
codegen_flags: <defaults>
</compile_context>

<pallas_src>
import jax
import jax.numpy as jnp
from jax.experimental import pallas as pl
from jax.experimental.pallas import tpu as pltpu


def _round_up(x, m):
    return (x + m - 1) // m * m


def pinn_kernel(x_ref, w1_ref, b1_ref, w2_ref, b2_ref, w3_ref, b3_ref, o_ref):
    # Transposed layout: batch on the lane axis.
    x = x_ref[...]                                              # (1, TN)

    # Layer 1: rank-1 "outer product" as a broadcast multiply (VPU), then tanh (EUP).
    h = jnp.tanh(w1_ref[...] * x + b1_ref[...])                 # (H,1)*(1,TN)+(H,1) -> (H, TN)

    # Layer 2: (H, H) @ (H, TN) on the MXU; result stays lane-dense (TN on lanes).
    h = jnp.dot(w2_ref[...], h, preferred_element_type=jnp.float32) + b2_ref[...]
    h = jnp.tanh(h)                                             # (H, TN)

    # Layer 3: broadcast multiply + sublane (XLU) reduction over H -> lane-dense (1, TN).
    out = jnp.sum(w3_ref[...] * h, axis=0, keepdims=True) + b3_ref[...]
    o_ref[...] = out.astype(o_ref.dtype)


def pinn_forward(x, params, *, tile_n=2048):
    """x: (N, 1) float32.  params: dict of weights/biases.  Returns (N, 1) float32."""
    w1, b1, w2, b2, w3, b3 = (params["w1"], params["b1"], params["w2"],
                              params["b2"], params["w3"], params["b3"])
    n = x.shape[0]

    # Lane-aligned batch tile (multiple of 128), capped at tile_n.
    tn = min(tile_n, _round_up(n, 128))
    n_pad = _round_up(n, tn)

    # Transposed, zero-padded input: (1, N_pad) with batch on lanes.
    xt = jnp.pad(x[:, 0].astype(jnp.float32), (0, n_pad - n)).reshape(1, n_pad)

    # Tiny weights stay untiled, whole-array resident in VMEM across all grid steps.
    vmem = pl.BlockSpec(memory_space=pltpu.MemorySpace.VMEM)

    out = pl.pallas_call(
        pinn_kernel,
        out_shape=jax.ShapeDtypeStruct((1, n_pad), jnp.float32),
        grid=(n_pad // tn,),
        in_specs=[
            pl.BlockSpec((1, tn), lambda i: (0, i)),   # x tile (batch on lanes)
            vmem, vmem, vmem, vmem, vmem, vmem,        # w1, b1, w2, b2, w3, b3
        ],
        out_specs=pl.BlockSpec((1, tn), lambda i: (0, i)),
        compiler_params=pltpu.CompilerParams(dimension_semantics=("parallel",)),
    )(xt, w1, b1, w2, b2, w3, b3)

    # Drop padded lanes, return in the original (N, 1) layout.
    return out[0, :n].reshape(n, 1)


def init_params(key, n_hidden=20):
    """Deterministic init mimicking nn.Linear's U(-1/sqrt(fan_in), 1/sqrt(fan_in)).

    Weight layouts (chosen for the transposed in-kernel compute):
      w1: (H, 1)  == PyTorch input_layer.weight (out, in)
      b1: (H, 1)  column bias
      w2: (H, H)  == PyTorch hidden_layer.weight (out, in)
      b2: (H, 1)  column bias
      w3: (H, 1)  == PyTorch output_layer.weight (1, H) transposed
      b3: (1, 1)
    """
    ks = jax.random.split(key, 6)

    def u(k, shape, fan_in):
        bound = 1.0 / jnp.sqrt(jnp.float32(fan_in))
        return jax.random.uniform(k, shape, jnp.float32, -bound, bound)

    return {
        "w1": u(ks[0], (n_hidden, 1), 1),
        "b1": u(ks[1], (n_hidden, 1), 1),
        "w2": u(ks[2], (n_hidden, n_hidden), n_hidden),
        "b2": u(ks[3], (n_hidden, 1), n_hidden),
        "w3": u(ks[4], (n_hidden, 1), n_hidden),
        "b3": u(ks[5], (1, 1), n_hidden),
    }


def pinn_forward_ref(x, p):
    """Pure-JAX reference of PINN.forward (standard (batch, feature) layout)."""
    h = jnp.tanh(x @ p["w1"].T + p["b1"].T)
    h = jnp.tanh(h @ p["w2"].T + p["b2"].T)
    return h @ p["w3"] + p["b3"]


def f_source(x):
    """Source term f(x) from the original script (pure JAX helper)."""
    return -jnp.exp(-x / 5.0) * ((1.0 / 25.0) * jnp.sin(x) - (1.0 / 5.0) * jnp.cos(x))


# TODO(synk): PINN.loss uses autograd (tf.gradients in the original, which is broken
# there anyway); only the forward pass is implemented as a Pallas kernel.


if __name__ == "__main__":
    key = jax.random.PRNGKey(0)
    n_hidden = 20
    n_test = 100

    params = init_params(key, n_hidden=n_hidden)

    # x_test = linspace(0, 10, 100).reshape(-1, 1), matching the PyTorch script.
    x_test = jnp.linspace(0.0, 10.0, n_test, dtype=jnp.float32).reshape(-1, 1)

    u_pred = pinn_forward(x_test, params)
    u_pred = jax.block_until_ready(u_pred)

    u_ref = pinn_forward_ref(x_test, params)
    assert u_pred.shape == (n_test, 1)
    assert jnp.allclose(u_pred, u_ref, atol=1e-5, rtol=1e-5)

    print("KERNEL_OK")
</pallas_src>

<mosaic_0001>
module attributes {stable_mosaic.version = 11 : i64} {
  func.func @pinn_kernel(%arg0: i32, %arg1: memref<1x128xf32, #tpu.memory_space<vmem>>, %arg2: memref<20x1xf32, #tpu.memory_space<vmem>>, %arg3: memref<20x1xf32, #tpu.memory_space<vmem>>, %arg4: memref<20x20xf32, #tpu.memory_space<vmem>>, %arg5: memref<20x1xf32, #tpu.memory_space<vmem>>, %arg6: memref<20x1xf32, #tpu.memory_space<vmem>>, %arg7: memref<1x1xf32, #tpu.memory_space<vmem>>, %arg8: memref<1x128xf32, #tpu.memory_space<vmem>>) attributes {dimension_semantics = [#tpu.dimension_semantics<parallel>], iteration_bounds = array<i64: 1>, scalar_prefetch = 0 : i64, scratch_operands = 0 : i64, tpu.core_type = #tpu.core_type<tc>, window_params = [{transform_indices = @transform_0, window_bounds = array<i64: 1, 128>}, {pipeline_mode = #tpu.pipeline_mode<synchronous>, transform_indices = @transform_1, window_bounds = array<i64: 20, 1>}, {pipeline_mode = #tpu.pipeline_mode<synchronous>, transform_indices = @transform_2, window_bounds = array<i64: 20, 1>}, {pipeline_mode = #tpu.pipeline_mode<synchronous>, transform_indices = @transform_3, window_bounds = array<i64: 20, 20>}, {pipeline_mode = #tpu.pipeline_mode<synchronous>, transform_indices = @transform_4, window_bounds = array<i64: 20, 1>}, {pipeline_mode = #tpu.pipeline_mode<synchronous>, transform_indices = @transform_5, window_bounds = array<i64: 20, 1>}, {pipeline_mode = #tpu.pipeline_mode<synchronous>, transform_indices = @transform_6, window_bounds = array<i64: 1, 1>}, {transform_indices = @transform_7, window_bounds = array<i64: 1, 128>}]} {
    %c0 = arith.constant 0 : index
    %c0_0 = arith.constant 0 : index
    %0 = vector.load %arg1[%c0, %c0_0] : memref<1x128xf32, #tpu.memory_space<vmem>>, vector<1x128xf32>
    %c0_1 = arith.constant 0 : index
    %c0_2 = arith.constant 0 : index
    %1 = vector.load %arg2[%c0_1, %c0_2] : memref<20x1xf32, #tpu.memory_space<vmem>>, vector<20x1xf32>
    %2 = vector.broadcast %1 : vector<20x1xf32> to vector<20x128xf32>
    %3 = vector.broadcast %0 : vector<1x128xf32> to vector<20x128xf32>
    %4 = arith.mulf %2, %3 : vector<20x128xf32>
    %c0_3 = arith.constant 0 : index
    %c0_4 = arith.constant 0 : index
    %5 = vector.load %arg3[%c0_3, %c0_4] : memref<20x1xf32, #tpu.memory_space<vmem>>, vector<20x1xf32>
    %6 = vector.broadcast %5 : vector<20x1xf32> to vector<20x128xf32>
    %7 = arith.addf %4, %6 : vector<20x128xf32>
    %8 = math.tanh %7 : vector<20x128xf32>
    %c0_5 = arith.constant 0 : index
    %c0_6 = arith.constant 0 : index
    %9 = vector.load %arg4[%c0_5, %c0_6] : memref<20x20xf32, #tpu.memory_space<vmem>>, vector<20x20xf32>
    %cst = arith.constant dense<0.000000e+00> : vector<20x128xf32>
    %10 = tpu.matmul %9, %8, %cst {dimension_numbers = #tpu.dot_dimension_numbers<[1], [0], [0], [1], [0, 0, 1, 1], [], []>} : vector<20x20xf32>, vector<20x128xf32>, vector<20x128xf32> -> vector<20x128xf32>
    %c0_7 = arith.constant 0 : index
    %c0_8 = arith.constant 0 : index
    %11 = vector.load %arg5[%c0_7, %c0_8] : memref<20x1xf32, #tpu.memory_space<vmem>>, vector<20x1xf32>
    %12 = vector.broadcast %11 : vector<20x1xf32> to vector<20x128xf32>
    %13 = arith.addf %10, %12 : vector<20x128xf32>
    %14 = math.tanh %13 : vector<20x128xf32>
    %c0_9 = arith.constant 0 : index
    %c0_10 = arith.constant 0 : index
    %15 = vector.load %arg6[%c0_9, %c0_10] : memref<20x1xf32, #tpu.memory_space<vmem>>, vector<20x1xf32>
    %16 = vector.broadcast %15 : vector<20x1xf32> to vector<20x128xf32>
    %17 = arith.mulf %16, %14 : vector<20x128xf32>
    %cst_11 = arith.constant dense<0.000000e+00> : vector<128xf32>
    %18 = vector.multi_reduction <add>, %17, %cst_11 [0] : vector<20x128xf32> to vector<128xf32>
    %19 = vector.shape_cast %18 : vector<128xf32> to vector<1x128xf32>
    %c0_12 = arith.constant 0 : index
    %c0_13 = arith.constant 0 : index
    %20 = vector.load %arg7[%c0_12, %c0_13] : memref<1x1xf32, #tpu.memory_space<vmem>>, vector<1x1xf32>
    %21 = vector.broadcast %20 : vector<1x1xf32> to vector<1x128xf32>
    %22 = arith.addf %19, %21 : vector<1x128xf32>
    %c0_14 = arith.constant 0 : index
    %c0_15 = arith.constant 0 : index
    %23 = vector.load %arg8[%c0_14, %c0_15] : memref<1x128xf32, #tpu.memory_space<vmem>>, vector<1x128xf32>
    tpu.vector_store %arg8[%c0_14, %c0_15], %22 {strides = array<i32>} : memref<1x128xf32, #tpu.memory_space<vmem>>, vector<1x128xf32>,
    return
  }
  func.func @transform_0(%arg0: i32) -> (i32, i32) {
    %c0_i32 = arith.constant 0 : i32
    %c0_i32_0 = arith.constant 0 : i32
    return %c0_i32, %arg0 : i32, i32
  }
  func.func @transform_1(%arg0: i32) -> (i32, i32) {
    %c0_i32 = arith.constant 0 : i32
    %c0_i32_0 = arith.constant 0 : i32
    %c0_i32_1 = arith.constant 0 : i32
    return %c0_i32, %c0_i32_0 : i32, i32
  }
  func.func @transform_2(%arg0: i32) -> (i32, i32) {
    %c0_i32 = arith.constant 0 : i32
    %c0_i32_0 = arith.constant 0 : i32
    %c0_i32_1 = arith.constant 0 : i32
    return %c0_i32, %c0_i32_0 : i32, i32
  }
  func.func @transform_3(%arg0: i32) -> (i32, i32) {
    %c0_i32 = arith.constant 0 : i32
    %c0_i32_0 = arith.constant 0 : i32
    %c0_i32_1 = arith.constant 0 : i32
    return %c0_i32, %c0_i32_0 : i32, i32
  }
  func.func @transform_4(%arg0: i32) -> (i32, i32) {
    %c0_i32 = arith.constant 0 : i32
    %c0_i32_0 = arith.constant 0 : i32
    %c0_i32_1 = arith.constant 0 : i32
    return %c0_i32, %c0_i32_0 : i32, i32
  }
  func.func @transform_5(%arg0: i32) -> (i32, i32) {
    %c0_i32 = arith.constant 0 : i32
    %c0_i32_0 = arith.constant 0 : i32
    %c0_i32_1 = arith.constant 0 : i32
    return %c0_i32, %c0_i32_0 : i32, i32
  }
  func.func @transform_6(%arg0: i32) -> (i32, i32) {
    %c0_i32 = arith.constant 0 : i32
    %c0_i32_0 = arith.constant 0 : i32
    %c0_i32_1 = arith.constant 0 : i32
    return %c0_i32, %c0_i32_0 : i32, i32
  }
  func.func @transform_7(%arg0: i32) -> (i32, i32) {
    %c0_i32 = arith.constant 0 : i32
    %c0_i32_0 = arith.constant 0 : i32
    return %c0_i32, %arg0 : i32, i32
  }
}

</mosaic_0001>

<llo_original>
// kernel: tpu_custom_call.1
$region0: #{tpu_custom_call.1}
  #allocation0 [shape = 'u32[]', space=smem, size = 0x4, offset = 0x4, fixed_abs, tag = 'smem constant byte address 0x4 - core index']
  #allocation1 [shape = 'u32[144,128]{1,0:T(1,128)}', space=vmem, size = 0x12000, scoped, tag = 'internal scratch']
  #allocation2 [shape = 'f32[1,1]{1,0:T(1,128)S(1)}', space=vmem, size = 0x200, scoped, tag = 'scoped memory for tpu_custom_call.1']
  %s0 = inlined_call_operand.vmem [shape: f32[1,128], index: 0, kind: input, shape index: {}]
  %s1 = inlined_call_operand.vmem [shape: f32[20,1], index: 1, kind: input, shape index: {}]
  %s2 = inlined_call_operand.vmem [shape: f32[20,1], index: 2, kind: input, shape index: {}]
  %s3 = inlined_call_operand.vmem [shape: f32[20,20], index: 3, kind: input, shape index: {}]
  %s4 = inlined_call_operand.vmem [shape: f32[20,1], index: 4, kind: input, shape index: {}]
  %s5 = inlined_call_operand.vmem [shape: f32[20,1], index: 5, kind: input, shape index: {}]
  %s6 = inlined_call_operand.<no memory space> [shape: f32[1,1], index: 6, kind: input, shape index: {}]
  %s7 = inlined_call_operand.hbm [shape: f32[1,128], index: 7, kind: output, shape index: {}]
  %s8 = sld [smem:[#allocation0]]
  $region38: #{tpu_custom_call.1} parent=0
    _
  %s10 = ssub.s32 1, %s8
  %s11 = scalar_select 0, %s10, %s8
  %v12 = vstv %s6
  %13 = vst [vmem:[#allocation2] sm:$0x1] %v12
  $region1: #{tpu_custom_call.1} parent=0
    #allocation3 [shape = 'u8[512]{0}', space=vmem, size = 0x400, scoped, tag = 'output window, operand 0, single buffered']
    #allocation4 [shape = 's32[1]{0}', space=sflag, size = 0x4, scoped, tag = 'scoped memory for tpu_custom_call.1']
    %14 = vsyncpa [#allocation4], 0
    // Predicated region
    $region2: #{tpu_custom_call.1} parent=1 // pred_check
      _
    $region3: #{tpu_custom_call.1} parent=1 // pred_check_branch
      %16 = sbr.rel (0) target = $region5
    $region4: #{tpu_custom_call.1} parent=1 // pred_region
      _
    $region5: #{tpu_custom_call.1} parent=1 // pred_fallthru
      _
    // Predicated region
    $region6: #{tpu_custom_call.1} parent=1 // pred_check
      _
    $region7: #{tpu_custom_call.1} parent=1 // pred_check_branch
      %18 = sbr.rel (0) target = $region9
    $region8: #{tpu_custom_call.1} parent=1 // pred_region
      _
    $region9: #{tpu_custom_call.1} parent=1 // pred_fallthru
      _
    // Predicated region
    $region10: #{tpu_custom_call.1} parent=1 // pred_check
      _
    $region11: #{tpu_custom_call.1} parent=1 // pred_check_branch
      %20 = sbr.rel (0) target = $region13
    $region12: #{tpu_custom_call.1} parent=1 // pred_region
      _
    $region13: #{tpu_custom_call.1} parent=1 // pred_fallthru
      _
    // Predicated region
    $region14: #{tpu_custom_call.1} parent=1 // pred_check
      _
    $region15: #{tpu_custom_call.1} parent=1 // pred_check_branch
      %22 = sbr.rel (0) target = $region17
    $region16: #{tpu_custom_call.1} parent=1 // pred_region
      _
    $region17: #{tpu_custom_call.1} parent=1 // pred_fallthru
      _
    // Predicated region
    $region18: #{tpu_custom_call.1} parent=1 // pred_check
      _
    $region19: #{tpu_custom_call.1} parent=1 // pred_check_branch
      %24 = sbr.rel (0) target = $region21
    $region20: #{tpu_custom_call.1} parent=1 // pred_region
      _
    $region21: #{tpu_custom_call.1} parent=1 // pred_fallthru
      _
    // Predicated region
    $region22: #{tpu_custom_call.1} parent=1 // pred_check
      _
    $region23: #{tpu_custom_call.1} parent=1 // pred_check_branch
      %26 = sbr.rel (0) target = $region25
    $region24: #{tpu_custom_call.1} parent=1 // pred_region
      _
    $region25: #{tpu_custom_call.1} parent=1 // pred_fallthru
      _
    // Predicated region
    $region26: #{tpu_custom_call.1} parent=1 // pred_check
      _
    $region27: #{tpu_custom_call.1} parent=1 // pred_check_branch
      %28 = sbr.rel (0) target = $region29
    $region28: #{tpu_custom_call.1} parent=1 // pred_region
      _
    $region29: #{tpu_custom_call.1} parent=1 // pred_fallthru
      _
    %v29 = vld [vmem:[%s0] sm:$0x1]
    %v30 = vld [vmem:[%s1] sm:$0xff]
    %v31 = vld [vmem:[%s1 + $0x8] sm:$0xff]
    %v32 = vld [vmem:[%s1 + $0x10] sm:$0xf]
    %34 = vset.pattern.permute.xlu0 0
    %35 = vperm.xlu0 %34, %v30
    %v36 = vpop.permute.xlu0 %35
    %39 = vset.pattern.permute.xlu0 0
    %40 = vperm.xlu0 %39, %v31
    %v41 = vpop.permute.xlu0 %40
    %44 = vset.pattern.permute.xlu0 0
    %45 = vperm.xlu0 %44, %v32
    %v46 = vpop.permute.xlu0 %45
    %v49 = vlaneseq
    %v50 = vshrl.u32 %v49, 7
    %v51 = vsub.s32 0, %v50
    %v52 = vrot.slane %v29, %v51
    %v54 = vmul.f32 %v36, %v52
    %v55 = vmul.f32 %v41, %v52
    %v56 = vmul.f32 %v46, %v52
    %v57 = vld [vmem:[%s2] sm:$0xff]
    %v58 = vld [vmem:[%s2 + $0x8] sm:$0xff]
    %v59 = vld [vmem:[%s2 + $0x10] sm:$0xf]
    %61 = vset.pattern.permute.xlu0 0
    %62 = vperm.xlu0 %61, %v57
    %v63 = vpop.permute.xlu0 %62
    %66 = vset.pattern.permute.xlu0 0
    %67 = vperm.xlu0 %66, %v58
    %v68 = vpop.permute.xlu0 %67
    %71 = vset.pattern.permute.xlu0 0
    %72 = vperm.xlu0 %71, %v59
    %v73 = vpop.permute.xlu0 %72
    %v75 = vadd.f32 %v54, %v63
    %v76 = vadd.f32 %v55, %v68
    %v77 = vadd.f32 %v56, %v73
    %v78 = vtanh.pop %v75
    %v79 = vtanh.pop %v76
    %v80 = vtanh.pop %v77
    %v81 = vld [vmem:[%s3] sm:$0xff]
    %v82 = vld [vmem:[%s3 + $0x8] sm:$0xff]
    %v83 = vld [vmem:[%s3 + $0x10] sm:$0xf]
    %v84 = vld [vmem:[%s4] sm:$0xff]
    %v85 = vld [vmem:[%s4 + $0x8] sm:$0xff]
    %v86 = vld [vmem:[%s4 + $0x10] sm:$0xf]
    %88 = vset.pattern.permute.xlu0 0
    %89 = vperm.xlu0 %88, %v84
    %v90 = vpop.permute.xlu0 %89
    %93 = vset.pattern.permute.xlu0 0
    %94 = vperm.xlu0 %93, %v85
    %v95 = vpop.permute.xlu0 %94
    %98 = vset.pattern.permute.xlu0 0
    %99 = vperm.xlu0 %98, %v86
    %v100 = vpop.permute.xlu0 %99
    %vm102 = vcmask 162816
    %v104 = vsel %vm102, %v81, 0
    %v107 = vsel %vm102, %v82, 0
    %v110 = vsel %vm102, %v83, 0
    %vm112 = vcmask 1043456
    %v114 = vsel %vm112, %v80, 0
    %116 = vmatprep.subr.mxu0 0.0
    %117 = vmatpush1.msra.mxu0 %v78
    %118 = vmatprep.subr.mxu0 0.0
    %119 = vmatpush1.msra.mxu0 %v79
    %120 = vmatprep.subr.mxu0 0.0
    %121 = vmatpush1.msra.mxu0 %v114
    %122 = vmatprep.subr.mxu0 0.0
    %123 = vmatpush1.msra.mxu0 0.0
    %124 = vmatprep.subr.mxu0 0.0
    %125 = vmatpush1.msra.mxu0 0.0
    %126 = vmatprep.subr.mxu0 0.0
    %127 = vmatpush1.msra.mxu0 0.0
    %128 = vmatprep.subr.mxu0 0.0
    %129 = vmatpush1.msra.mxu0 0.0
    %130 = vmatprep.subr.mxu0 0.0
    %131 = vmatpush1.msra.mxu0 0.0
    %132 = vmatprep.subr.mxu0 0.0
    %133 = vmatpush1.msra.mxu0 0.0
    %134 = vmatprep.subr.mxu0 0.0
    %135 = vmatpush1.msra.mxu0 0.0
    %136 = vmatprep.subr.mxu0 0.0
    %137 = vmatpush1.msra.mxu0 0.0
    %138 = vmatprep.subr.mxu0 0.0
    %139 = vmatpush1.msra.mxu0 0.0
    %140 = vmatprep.subr.mxu0 0.0
    %141 = vmatpush1.msra.mxu0 0.0
    %142 = vmatprep.subr.mxu0 0.0
    %143 = vmatpush1.msra.mxu0 0.0
    %144 = vmatprep.subr.mxu0 0.0
    %145 = vmatpush1.msra.mxu0 0.0
    %146 = vmatprep.subr.mxu0 0.0
    %147 = vmatpush1.msra.mxu0 0.0
    %148 = vmatprep.subr.mxu0 0.0
    %149 = vmatpush1.msra.mxu0 0.0
    %150 = vmatprep.subr.mxu0 0.0
    %151 = vmatpush1.msra.mxu0 0.0
    %152 = vmatprep.subr.mxu0 0.0
    %153 = vmatpush1.msra.mxu0 0.0
    %154 = vmatprep.subr.mxu0 0.0
    %155 = vmatpush1.msra.mxu0 0.0
    %156 = vmatprep.subr.mxu0 0.0
    %157 = vmatpush1.msra.mxu0 0.0
    %158 = vmatprep.subr.mxu0 0.0
    %159 = vmatpush1.msra.mxu0 0.0
    %160 = vmatprep.subr.mxu0 0.0
    %161 = vmatpush1.msra.mxu0 0.0
    %162 = vmatprep.subr.mxu0 0.0
    %163 = vmatpush1.msra.mxu0 0.0
    %164 = vmatprep.subr.mxu0 0.0
    %165 = vmatpush1.msra.mxu0 0.0
    %166 = vmatprep.subr.mxu0 0.0
    %167 = vmatpush1.msra.mxu0 0.0
    %168 = vmatprep.subr.mxu0 0.0
    %169 = vmatpush1.msra.mxu0 0.0
    %170 = vmatprep.subr.mxu0 0.0
    %171 = vmatpush1.msra.mxu0 0.0
    %172 = vmatprep.subr.mxu0 0.0
    %173 = vmatpush1.msra.mxu0 0.0
    %174 = vmatprep.subr.mxu0 0.0
    %175 = vmatpush1.msra.mxu0 0.0
    %176 = vmatprep.subr.mxu0 0.0
    %177 = vmatpush1.msra.mxu0 0.0
    %178 = vmatprep.subr.mxu0 0.0
    %179 = vmatpush1.msra.mxu0 0.0
    %180 = vmatprep.mubr.f32.mxu0 0.0
    %181 = vmatmul.mubr.f32.gmra.mrb[0].mxu0 %v104
    %v182 = vpop.f32.mrb[0].mxu0
    %v183 = vadd.f32 %v90, %v182
    %v184 = vpop.f32.mrb[0].mxu0
    %185 = vmatprep.mubr.f32.mxu0 0.0
    %186 = vmatmul.mubr.f32.gmra.mrb[0].mxu0 %v107
    %v187 = vpop.f32.mrb[0].mxu0
    %v188 = vadd.f32 %v95, %v187
    %v189 = vpop.f32.mrb[0].mxu0
    %190 = vmatprep.mubr.f32.mxu0 0.0
    %191 = vmatmul.mubr.f32.gmra.mrb[0].mxu0 %v110
    %v192 = vpop.f32.mrb[0].mxu0
    %v193 = vadd.f32 %v100, %v192
    %v194 = vpop.f32.mrb[0].mxu0
    %195 = vdwg.mxu0
    %v196 = vtanh.pop %v183
    %v197 = vtanh.pop %v188
    %v198 = vtanh.pop %v193
    %v199 = vld [vmem:[%s5] sm:$0xff]
    %v200 = vld [vmem:[%s5 + $0x8] sm:$0xff]
    %v201 = vld [vmem:[%s5 + $0x10] sm:$0xf]
    %203 = vset.pattern.permute.xlu0 0
    %204 = vperm.xlu0 %203, %v199
    %v205 = vpop.permute.xlu0 %204
    %208 = vset.pattern.permute.xlu0 0
    %209 = vperm.xlu0 %208, %v200
    %v210 = vpop.permute.xlu0 %209
    %213 = vset.pattern.permute.xlu0 0
    %214 = vperm.xlu0 %213, %v201
    %v215 = vpop.permute.xlu0 %214
    %v217 = vmul.f32 %v205, %v196
    %v218 = vmul.f32 %v210, %v197
    %v219 = vmul.f32 %v215, %v198
    %v220 = vadd.f32 %v217, %v218
    %v221 = vsel %vm112, %v219, 0.0
    %v222 = vadd.f32 %v220, %v221
    %v223 = vrot.slane %v222, 4
    %v224 = vadd.f32 %v222, %v223
    %v225 = vrot.slane %v224, 2
    %v226 = vadd.f32 %v224, %v225
    %v227 = vrot.slane %v226, 1
    %v228 = vadd.f32 %v226, %v227
    %v229 = vld [vmem:[#allocation2] sm:$0x1]
    %231 = vset.pattern.permute.xlu0 0
    %232 = vperm.xlu0 %231, %v229
    %v233 = vpop.permute.xlu0 %232
    %v235 = vlaneseq
    %v236 = vshrl.u32 %v235, 7
    %v237 = vsub.s32 0, %v236
    %v238 = vrot.slane %v233, %v237
    %v239 = vadd.f32 %v228, %v238
    %240 = vst [vmem:[#allocation3] sm:$0x1] %v239
    // Predicated region
    $region30: #{tpu_custom_call.1} parent=1 // pred_check
      _
    $region31: #{tpu_custom_call.1} parent=1 // pred_check_branch
      %242 = sbr.rel (0) target = $region33
    $region32: #{tpu_custom_call.1} parent=1 // pred_region
      %s244 = ssub.s32 16, 16
      %245 = vsyncadd [#allocation4], %s244
      %s247 = sshll.u32 [#allocation3], 4
      %s248 = int_to_ptr.vmem [resolvable:$true] %s247
      %250 = dma.vmem_to_hbm [thread:$0]  %s248, 16, %s7, [#allocation4]
    $region33: #{tpu_custom_call.1} parent=1 // pred_fallthru
      _
    // Predicated region
    $region34: #{tpu_custom_call.1} parent=1 // pred_check
      _
    $region35: #{tpu_custom_call.1} parent=1 // pred_check_branch
      %252 = sbr.rel (0) target = $region37
    $region36: #{tpu_custom_call.1} parent=1 // pred_region
      %253 = dma.done [#allocation4], 16
    $region37: #{tpu_custom_call.1} parent=1 // pred_fallthru
      _
    %254 = vsyncpa [#allocation4], 1

</llo_original>
